<compile_context>
chip_gen: v6e
topology: v6e:2x2x1
jax: 0.10.0
libtpu: 0.0.40
codegen_flags: <defaults>
</compile_context>

<pallas_src>
import jax
import jax.numpy as jnp
import numpy as np
from jax.experimental import pallas as pl
from jax.experimental.pallas import tpu as pltpu

# ----- module "hyperparameters" (globals in the original file) -----
BASE_MASK_SIZE_ = 4               # base_mask_size_
BASE_MASK_HEIGHT_WIDTH_ = (4, 4)  # base_mask_height_width_ (unused in forward)

_LANE = 128
_SMALL_FASTPATH_BYTES = 1 << 20   # below this, plain XLA multiply wins
_TARGET_TILE_BYTES = 4 << 20      # per-tile budget (x2 in + x2 out buffers ≈ 16 MiB)
_VMEM_LIMIT_BYTES = 48 << 20      # safe on v5e/v6e (128 MiB phys) and v7x (64 MiB phys)


def _bilinear_matrix_align_corners(out_size: int, in_size: int) -> jnp.ndarray:
    """Dense (out_size, in_size) matrix implementing 1-D bilinear interpolation
    with align_corners=True (PyTorch nn.Upsample semantics)."""
    if in_size == 1:
        return jnp.ones((out_size, 1), dtype=jnp.float32)
    if out_size == 1:
        # align_corners=True with a single output sample picks the first input sample
        A = np.zeros((1, in_size), dtype=np.float32)
        A[0, 0] = 1.0
        return jnp.asarray(A)
    i = np.arange(out_size, dtype=np.float64)
    src = i * (in_size - 1) / (out_size - 1)
    lo = np.floor(src).astype(np.int64)
    lo = np.clip(lo, 0, in_size - 2)
    frac = src - lo
    A = np.zeros((out_size, in_size), dtype=np.float32)
    A[np.arange(out_size), lo] = (1.0 - frac).astype(np.float32)
    A[np.arange(out_size), lo + 1] = frac.astype(np.float32)
    return jnp.asarray(A)


def _mask_mul_kernel(m_ref, x_ref, o_ref):
    # m_ref: (1, TC)   real_mask slab for this column tile
    # x_ref: (TR, TC)  streamed lane-dense tile of flattened x
    # o_ref: (TR, TC)  output tile
    o_ref[...] = (x_ref[...] * m_ref[...]).astype(o_ref.dtype)


def _choose_tiles(rows: int, cols: int, itemsize: int,
                  target_bytes: int = _TARGET_TILE_BYTES):
    """Pick (TR, TC) row/column tile sizes.

    * Sublane granularity is dtype-aware: 8 (f32), 16 (bf16/f16), 32 (int8/fp8).
    * No divisibility requirement on `rows`/`cols`: ragged last tiles are legal
      (masked) and pl.cdiv sizes the grid.
    * Never returns a whole-array block: if a minimum-row tile over full cols
      would blow the budget, the column axis is tiled in multiples of 128.
    * When the whole row dim fits one tile, it is still split into two grid
      steps (if >= 2 sublane groups) so a 2-TC chip (v7x) gets both cores busy.
    """
    sub = 8 * max(1, 4 // itemsize)        # (8,128) f32 / (16,128) bf16 / (32,128) int8
    # --- column tile ---
    if sub * cols * itemsize <= target_bytes:
        tc = cols                          # common case: one lane-dense slab per row tile
    else:
        tc = max(_LANE, (target_bytes // (sub * itemsize)) // _LANE * _LANE)
        tc = min(tc, cols)
    # --- row tile ---
    budget_rows = max(sub, (target_bytes // max(1, tc * itemsize)) // sub * sub)
    if rows <= budget_rows:
        if rows >= 2 * sub:
            # split the row axis in two sublane-aligned halves -> 2-step grid
            half = -(-((rows + 1) // 2) // sub) * sub
            tr = min(half, rows)
        else:
            tr = rows                      # full-dim block: always legal
    else:
        tr = budget_rows                   # multiple of sub, ragged tail handled by cdiv
    return tr, tc


class DynamicMaskPairPallas:
    def __init__(self, img_size=16, mask_size=16,
                 upper_y=0, lower_y=0, upper_x=0, lower_x=0,
                 base_mask_size=BASE_MASK_SIZE_,
                 base_mask_height_width=BASE_MASK_HEIGHT_WIDTH_):
        self.episilon = 1e-12
        self.init_weights = 0.5
        self.img_size = img_size
        self.mask_size = mask_size
        self.upper_y = upper_y
        self.lower_y = lower_y
        self.upper_x = upper_x
        self.lower_x = lower_x
        self.base_mask_size = base_mask_size
        self.base_mask_height = base_mask_height_width[0]
        self.base_mask_width = base_mask_height_width[1]
        self.mask_batch = int(img_size / mask_size * (img_size / mask_size))
        # Parameter: (1, S, S) filled with 0.5 (deterministic init, same as PyTorch)
        self.mask = jnp.full((1, base_mask_size, base_mask_size),
                             self.init_weights, dtype=jnp.float32)
        # Interpolation matrices (align_corners=True bilinear), built once.
        self._A = _bilinear_matrix_align_corners(img_size, base_mask_size)     # (H, S)
        self._Bt = _bilinear_matrix_align_corners(img_size, base_mask_size).T  # (S, W)

    def __call__(self, x, *, force_pallas: bool = False):
        # x: (N, C, H, W), H = W = img_size
        N, C, H, W = x.shape
        if H != self.img_size or W != self.img_size:
            raise ValueError(
                f"expected spatial dims ({self.img_size},{self.img_size}), got ({H},{W})")

        # Hoisted tiny matmuls (S=4 contraction — pointless on the MXU):
        # real_mask = A @ M @ B^T  -> (H, W); negligible XLA cost.
        real_mask = (self._A @ self.mask[0] @ self._Bt).astype(x.dtype)

        rows, cols = N * C, H * W
        itemsize = jnp.dtype(x.dtype).itemsize
        total_bytes = rows * cols * itemsize

        # Small-tensor / narrow-lane fast path: fused XLA multiply beats kernel
        # dispatch + a 1-step grid, and sidesteps masked stores for H*W < 128.
        if not force_pallas and (cols < _LANE or total_bytes < _SMALL_FASTPATH_BYTES):
            return x * real_mask[None, None, :, :]

        # Lane-dense flattened views: last dim H*W (multiple of 128 for H=W>=16).
        x2 = x.reshape(rows, cols)
        m2 = real_mask.reshape(1, cols)

        TR, TC = _choose_tiles(rows, cols, itemsize)
        grid = (pl.cdiv(rows, TR), pl.cdiv(cols, TC))

        cost = pl.CostEstimate(
            flops=rows * cols,
            transcendentals=0,
            bytes_accessed=(2 * rows * cols + cols) * itemsize,
        )

        # TODO(synk): expose input_output_aliases={1: 0} for callers that can
        # donate x (removes the extra output allocation; HBM traffic unchanged).
        out2 = pl.pallas_call(
            _mask_mul_kernel,
            out_shape=jax.ShapeDtypeStruct((rows, cols), x.dtype),
            grid_spec=pltpu.PrefetchScalarGridSpec(
                num_scalar_prefetch=0,
                grid=grid,
                in_specs=[
                    # mask: only depends on the column-tile index; with TC==cols
                    # (common case) it stays resident in VMEM for the whole grid.
                    pl.BlockSpec((1, TC), lambda i, j: (0, j)),
                    # x: streamed, double-buffered (TR, TC) tiles
                    pl.BlockSpec((TR, TC), lambda i, j: (i, j)),
                ],
                out_specs=pl.BlockSpec((TR, TC), lambda i, j: (i, j)),
            ),
            compiler_params=pltpu.CompilerParams(
                # both axes are independent -> shard across TCs on v7x,
                # harmless on single-TC v5e/v6e.
                dimension_semantics=("parallel", "parallel"),
                vmem_limit_bytes=_VMEM_LIMIT_BYTES,
            ),
            cost_estimate=cost,
        )(m2, x2)

        return out2.reshape(N, C, H, W)


if __name__ == "__main__":
    key = jax.random.PRNGKey(0)
    N, C, IMG = 2, 4, 16
    x = jax.random.normal(key, (N, C, IMG, IMG), dtype=jnp.float32)

    module = DynamicMaskPairPallas(img_size=IMG, mask_size=IMG,
                                   base_mask_size=BASE_MASK_SIZE_,
                                   base_mask_height_width=BASE_MASK_HEIGHT_WIDTH_)

    # Pure-JAX reference (separable align_corners bilinear upsample + broadcast mul)
    rm_ref = module._A @ module.mask[0] @ module._Bt
    ref = x * rm_ref[None, None, :, :]

    # 1) Default path: tiny tensor -> plain-XLA fast path.
    out_fast = jax.block_until_ready(module(x))
    np.testing.assert_allclose(np.asarray(out_fast), np.asarray(ref),
                               rtol=1e-5, atol=1e-5)

    # 2) Forced Pallas path: exercises the kernel end-to-end on TPU.
    out_pallas = jax.block_until_ready(module(x, force_pallas=True))
    np.testing.assert_allclose(np.asarray(out_pallas), np.asarray(ref),
                               rtol=1e-5, atol=1e-5)

    print("KERNEL_OK")
</pallas_src>

<mosaic_0001>
module attributes {stable_mosaic.version = 11 : i64} {
  func.func @_mask_mul_kernel(%arg0: i32, %arg1: i32, %arg2: memref<1x256xf32, #tpu.memory_space<vmem>>, %arg3: memref<8x256xf32, #tpu.memory_space<vmem>>, %arg4: memref<8x256xf32, #tpu.memory_space<vmem>>) attributes {dimension_semantics = [#tpu.dimension_semantics<parallel>, #tpu.dimension_semantics<parallel>], iteration_bounds = array<i64: 1, 1>, scalar_prefetch = 0 : i64, scratch_operands = 0 : i64, tpu.core_type = #tpu.core_type<tc>, window_params = [{transform_indices = @transform_0, window_bounds = array<i64: 1, 256>}, {transform_indices = @transform_1, window_bounds = array<i64: 8, 256>}, {transform_indices = @transform_2, window_bounds = array<i64: 8, 256>}]} {
    %c0 = arith.constant 0 : index
    %c0_0 = arith.constant 0 : index
    %0 = vector.load %arg3[%c0, %c0_0] : memref<8x256xf32, #tpu.memory_space<vmem>>, vector<8x256xf32>
    %c0_1 = arith.constant 0 : index
    %c0_2 = arith.constant 0 : index
    %1 = vector.load %arg2[%c0_1, %c0_2] : memref<1x256xf32, #tpu.memory_space<vmem>>, vector<1x256xf32>
    %2 = vector.broadcast %1 : vector<1x256xf32> to vector<8x256xf32>
    %3 = arith.mulf %0, %2 : vector<8x256xf32>
    %c0_3 = arith.constant 0 : index
    %c0_4 = arith.constant 0 : index
    %4 = vector.load %arg4[%c0_3, %c0_4] : memref<8x256xf32, #tpu.memory_space<vmem>>, vector<8x256xf32>
    tpu.vector_store %arg4[%c0_3, %c0_4], %3 {strides = array<i32>} : memref<8x256xf32, #tpu.memory_space<vmem>>, vector<8x256xf32>,
    return
  }
  func.func @transform_0(%arg0: i32, %arg1: i32) -> (i32, i32) {
    %c0_i32 = arith.constant 0 : i32
    %c0_i32_0 = arith.constant 0 : i32
    return %c0_i32, %arg1 : i32, i32
  }
  func.func @transform_1(%arg0: i32, %arg1: i32) -> (i32, i32) {
    %c0_i32 = arith.constant 0 : i32
    return %arg0, %arg1 : i32, i32
  }
  func.func @transform_2(%arg0: i32, %arg1: i32) -> (i32, i32) {
    %c0_i32 = arith.constant 0 : i32
    return %arg0, %arg1 : i32, i32
  }
}

</mosaic_0001>

<llo_original>
// kernel: tpu_custom_call.1
$region0: #{tpu_custom_call.1}
  #allocation0 [shape = 'u32[]', space=smem, size = 0x4, offset = 0x4, fixed_abs, tag = 'smem constant byte address 0x4 - core index']
  #allocation1 [shape = 'u32[144,128]{1,0:T(1,128)}', space=vmem, size = 0x12000, scoped, tag = 'internal scratch']
  %s0 = inlined_call_operand.hbm [shape: f32[1,256], index: 0, kind: input, shape index: {}]
  %s1 = inlined_call_operand.hbm [shape: f32[8,256], index: 1, kind: input, shape index: {}]
  %s2 = inlined_call_operand.hbm [shape: f32[8,256], index: 2, kind: output, shape index: {}]
  %s3 = sld [smem:[#allocation0]]
  $region26: #{tpu_custom_call.1} parent=0
    _
  %s5 = ssub.s32 1, %s3
  %s6 = scalar_select 0, %s5, %s3
  $region1: #{tpu_custom_call.1} parent=0
    #allocation2 [shape = 'u8[1024]{0}', space=vmem, size = 0x400, scoped, tag = 'input window, operand 0, single buffered']
    #allocation3 [shape = 's32[1]{0}', space=sflag, size = 0x4, scoped, tag = 'scoped memory for tpu_custom_call.1']
    #allocation4 [shape = 's32[1]{0}', space=sflag, size = 0x4, scoped, tag = 'scoped memory for tpu_custom_call.1']
    #allocation5 [shape = 'u8[8192]{0}', space=vmem, size = 0x2000, scoped, tag = 'input window, operand 1, single buffered']
    #allocation6 [shape = 's32[1]{0}', space=sflag, size = 0x4, scoped, tag = 'scoped memory for tpu_custom_call.1']
    #allocation7 [shape = 'u8[8192]{0}', space=vmem, size = 0x2000, scoped, tag = 'output window, operand 0, single buffered']
    %7 = vsyncpa [#allocation3], 0
    %8 = vsyncpa [#allocation6], 0
    %9 = vsyncpa [#allocation4], 0
    // Predicated region
    $region2: #{tpu_custom_call.1} parent=1 // pred_check
      _
    $region3: #{tpu_custom_call.1} parent=1 // pred_check_branch
      %11 = sbr.rel (0) target = $region5
    $region4: #{tpu_custom_call.1} parent=1 // pred_region
      %s13 = ssub.s32 32, 32
      %14 = vsyncadd [#allocation3], %s13
      %s16 = sshll.u32 [#allocation2], 4
      %s17 = int_to_ptr.vmem [resolvable:$true] %s16
      %19 = dma.hbm_to_vmem [thread:$0]  %s0, 32, %s17, [#allocation3]
    $region5: #{tpu_custom_call.1} parent=1 // pred_fallthru
      _
    // Predicated region
    $region6: #{tpu_custom_call.1} parent=1 // pred_check
      _
    $region7: #{tpu_custom_call.1} parent=1 // pred_check_branch
      %21 = sbr.rel (0) target = $region9
    $region8: #{tpu_custom_call.1} parent=1 // pred_region
      %s23 = ssub.s32 256, 256
      %24 = vsyncadd [#allocation6], %s23
      %s26 = sshll.u32 [#allocation5], 4
      %s27 = int_to_ptr.vmem [resolvable:$true] %s26
      %29 = dma.hbm_to_vmem [thread:$0]  %s1, 256, %s27, [#allocation6]
    $region9: #{tpu_custom_call.1} parent=1 // pred_fallthru
      _
    // Predicated region
    $region10: #{tpu_custom_call.1} parent=1 // pred_check
      _
    $region11: #{tpu_custom_call.1} parent=1 // pred_check_branch
      %31 = sbr.rel (0) target = $region13
    $region12: #{tpu_custom_call.1} parent=1 // pred_region
      %32 = dma.done [#allocation3], 32
    $region13: #{tpu_custom_call.1} parent=1 // pred_fallthru
      _
    // Predicated region
    $region14: #{tpu_custom_call.1} parent=1 // pred_check
      _
    $region15: #{tpu_custom_call.1} parent=1 // pred_check_branch
      %34 = sbr.rel (0) target = $region17
    $region16: #{tpu_custom_call.1} parent=1 // pred_region
      %35 = dma.done [#allocation6], 256
    $region17: #{tpu_custom_call.1} parent=1 // pred_fallthru
      _
    %v36 = vld [vmem:[#allocation5] sm:$0xff]
    %v37 = vld [vmem:[#allocation5 + $0x8] sm:$0xff]
    %v38 = vld [vmem:[#allocation2] sm:$0x3]
    %v40 = vlaneseq
    %v41 = vshrl.u32 %v40, 7
    %v42 = vsub.s32 0, %v41
    %v43 = vrot.slane %v38, %v42
    %v44 = vlaneseq
    %v45 = vshrl.u32 %v44, 7
    %v46 = vsub.s32 1, %v45
    %v47 = vrot.slane %v38, %v46
    %v50 = vmul.f32 %v36, %v43
    %v51 = vmul.f32 %v37, %v47
    %52 = vst [vmem:[#allocation7] sm:$0xff] %v50
    %53 = vst [vmem:[#allocation7 + $0x8] sm:$0xff] %v51
    // Predicated region
    $region18: #{tpu_custom_call.1} parent=1 // pred_check
      _
    $region19: #{tpu_custom_call.1} parent=1 // pred_check_branch
      %55 = sbr.rel (0) target = $region21
    $region20: #{tpu_custom_call.1} parent=1 // pred_region
      %s57 = ssub.s32 256, 256
      %58 = vsyncadd [#allocation4], %s57
      %s60 = sshll.u32 [#allocation7], 4
      %s61 = int_to_ptr.vmem [resolvable:$true] %s60
      %63 = dma.vmem_to_hbm [thread:$0]  %s61, 256, %s2, [#allocation4]
    $region21: #{tpu_custom_call.1} parent=1 // pred_fallthru
      _
    // Predicated region
    $region22: #{tpu_custom_call.1} parent=1 // pred_check
      _
    $region23: #{tpu_custom_call.1} parent=1 // pred_check_branch
      %65 = sbr.rel (0) target = $region25
    $region24: #{tpu_custom_call.1} parent=1 // pred_region
      %66 = dma.done [#allocation4], 256
    $region25: #{tpu_custom_call.1} parent=1 // pred_fallthru
      _
    %67 = vsyncpa [#allocation3], 1
    %68 = vsyncpa [#allocation6], 1
    %69 = vsyncpa [#allocation4], 1

</llo_original>
